<compile_context>
chip_gen: v7x
topology: tpu7x:2x2x1
jax: 0.10.0
libtpu: 0.0.40
codegen_flags: <defaults>
</compile_context>

<pallas_src>
import functools

import jax
import jax.numpy as jnp
import numpy as np
from jax.experimental import pallas as pl
from jax.experimental.pallas import tpu as pltpu

_LANE = 128
_SUBLANE = 8


def _round_up(x, m):
    return ((x + m - 1) // m) * m


def _vmem_tile_bytes(shape, itemsize):
    """VMEM footprint of a 2-D block after (8,128) layout tiling."""
    return _round_up(int(shape[0]), _SUBLANE) * _round_up(int(shape[1]), _LANE) * itemsize


def _vmem_capacity_bytes():
    try:
        return int(pltpu.get_tpu_info().vmem_capacity_bytes)
    except Exception:
        return 64 * 1024 * 1024  # conservative default: v7x per-TC VMEM


def _apply_activation(h, name):
    # EUP-cheap forms: sigmoid via a single tanh (instead of exp + reciprocal);
    # softplus in its numerically stable exp + log1p form.
    if name == "tanh":
        return jnp.tanh(h)
    if name == "sigmoid":
        return 0.5 * (jnp.tanh(0.5 * h) + 1.0)
    if name == "softplus":
        return jnp.maximum(h, 0.0) + jnp.log1p(jnp.exp(-jnp.abs(h)))
    raise ValueError(f"Unsupported activation function: {name}")


# ----------------------------------------------------------------------------
# Kernel
# ----------------------------------------------------------------------------
def _mlp_kernel(activations, n_layers, hidden_dtype, *refs):
    """refs = (x, W0, b0, W1, b1, ..., out).

    x   : (TB, D0)  f32 batch tile (input normalization folded into W0/b0).
    Wi  : (Di, Di+1) weight, full array, VMEM-resident across grid steps.
          Layer 0 is always f32; hidden layers are compute_dtype (f32 or bf16).
    bi  : (1, Di+1) f32 bias.
    out : (TB, DL) f32 output tile (last grid step may be partial -> masked store).
    """
    x_ref = refs[0]
    out_ref = refs[-1]
    wb = refs[1:-1]
    assert len(wb) == 2 * n_layers

    h = x_ref[...]  # f32
    for i in range(n_layers):
        w = wb[2 * i][...]
        b = wb[2 * i + 1][...]
        # MXU matmul, always f32 accumulation; bias add + activation in f32.
        h = jnp.dot(h.astype(w.dtype), w, preferred_element_type=jnp.float32) + b
        if i < n_layers - 1:
            h = _apply_activation(h, activations[i]).astype(hidden_dtype)
        # last layer: identity, matching the torch module
    out_ref[...] = h.astype(out_ref.dtype)


def _mlp_pallas(x, weights, biases, activations, hidden_dtype, batch_tile,
                out_features, vmem_limit, cost_estimate):
    """Run the fused MLP kernel over an (unpadded) (batch, D0) input."""
    n_layers = len(weights)
    batch, d_in = x.shape
    steps = -(-batch // batch_tile)  # cdiv; last block masked by Pallas if partial

    in_specs = [pl.BlockSpec((batch_tile, d_in), lambda i: (i, 0))]
    operands = [x]
    for w, b in zip(weights, biases):
        # Full-array blocks + constant index map -> fetched once, VMEM-resident.
        in_specs.append(pl.BlockSpec(w.shape, lambda i: (0, 0)))
        in_specs.append(pl.BlockSpec(b.shape, lambda i: (0, 0)))
        operands.append(w)
        operands.append(b)

    kernel = functools.partial(_mlp_kernel, tuple(activations), n_layers, hidden_dtype)
    return pl.pallas_call(
        kernel,
        out_shape=jax.ShapeDtypeStruct((batch, out_features), jnp.float32),
        grid=(steps,),
        in_specs=in_specs,
        out_specs=pl.BlockSpec((batch_tile, out_features), lambda i: (i, 0)),
        compiler_params=pltpu.CompilerParams(
            dimension_semantics=("parallel",),
            vmem_limit_bytes=int(vmem_limit),
        ),
        cost_estimate=cost_estimate,
    )(*operands)


# ----------------------------------------------------------------------------
# Module-equivalent wrapper
# ----------------------------------------------------------------------------
class FullyConnectedNetworkPallas:
    def __init__(self, in_features, out_features, activations, widths,
                 zero_at_zero=False, input_bias=None, input_transform=None,
                 compute_dtype=jnp.float32, max_batch_tile=1024,
                 key=jax.random.PRNGKey(0)):
        if len(activations) != len(widths) - 2:
            raise ValueError("Number of activations must be two less than number of widths.")
        if widths[-1] != out_features:
            raise ValueError("Last width must match number of output channels.")
        if widths[0] != in_features:
            raise ValueError("First width must match number of input channels.")

        self.in_features = int(in_features)
        self.out_features = int(out_features)
        self.activations = list(activations)
        self.widths = list(widths)
        self.zero_at_zero = bool(zero_at_zero)
        self.compute_dtype = jnp.dtype(compute_dtype)
        self._hidden_dtype = (jnp.bfloat16 if self.compute_dtype == jnp.dtype(jnp.bfloat16)
                              else jnp.float32)
        self.max_batch_tile = max(_round_up(int(max_batch_tile), _SUBLANE), _SUBLANE)

        if input_bias is None:
            input_bias_np = np.zeros((in_features,), np.float32)
        else:
            input_bias_np = np.asarray(input_bias, np.float32).reshape(-1)
        if input_transform is None:
            input_transform_np = np.ones((in_features,), np.float32)
        else:
            input_transform_np = np.asarray(input_transform, np.float32).reshape(-1)

        # ---- parameter init mirroring torch.nn.Linear defaults ----------------
        n_layers = len(widths) - 1
        orig_w_t, orig_b = [], []
        for i in range(n_layers):
            fan_in, fan_out = widths[i], widths[i + 1]
            key, kw, kb = jax.random.split(key, 3)
            bound = 1.0 / np.sqrt(fan_in)
            w = jax.random.uniform(kw, (fan_out, fan_in), jnp.float32, -bound, bound)
            b = jax.random.uniform(kb, (fan_out,), jnp.float32, -bound, bound)
            orig_w_t.append(np.asarray(w, np.float32).T)  # (in, out) == torch_weight.T
            orig_b.append(np.asarray(b, np.float32))

        # Keep original (unfolded, unpadded) params for the torch-semantics reference.
        self._orig_weights_t = [jnp.asarray(w) for w in orig_w_t]
        self._orig_biases = [jnp.asarray(b) for b in orig_b]
        self._input_bias_vec = jnp.asarray(input_bias_np)
        self._input_transform_vec = jnp.asarray(input_transform_np)

        # ---- fold input normalization into layer 0 (exact f32 algebra) --------
        eff_w = [w.copy() for w in orig_w_t]
        eff_b = [b.reshape(1, -1).copy() for b in orig_b]
        eff_w[0] = (input_transform_np[:, None] * orig_w_t[0]).astype(np.float32)
        eff_b[0] = (eff_b[0]
                    - (input_bias_np * input_transform_np).reshape(1, -1) @ orig_w_t[0]
                    ).astype(np.float32)

        # ---- pad only hidden widths to lane multiples; in/out stay unpadded ---
        dims_in, dims_out = [], []
        for i in range(n_layers):
            d_in = self.in_features if i == 0 else _round_up(widths[i], _LANE)
            d_out = self.out_features if i == n_layers - 1 else _round_up(widths[i + 1], _LANE)
            dims_in.append(d_in)
            dims_out.append(d_out)

        self.padded_weights, self.padded_biases = [], []
        for i in range(n_layers):
            din, dout = widths[i], widths[i + 1]
            wp = np.zeros((dims_in[i], dims_out[i]), np.float32)
            wp[:din, :dout] = eff_w[i]
            bp = np.zeros((1, dims_out[i]), np.float32)
            bp[:, :dout] = eff_b[i]
            # Layer 0 stays f32 so the folded normalization / raw x are not bf16-quantized.
            w_dtype = jnp.float32 if i == 0 else self.compute_dtype
            self.padded_weights.append(jnp.asarray(wp, w_dtype))
            self.padded_biases.append(jnp.asarray(bp, jnp.float32))

        # ---- zero_at_zero: fold f(0), computed with the runtime params --------
        if self.zero_at_zero:
            f0 = self._runtime_chain(jnp.zeros((1, self.in_features), jnp.float32))
            self.padded_biases[-1] = (self.padded_biases[-1] - f0).astype(jnp.float32)

        # ---- VMEM bookkeeping (generation aware) -------------------------------
        self._param_vmem_bytes = (
            sum(_vmem_tile_bytes(w.shape, w.dtype.itemsize) for w in self.padded_weights)
            + sum(_vmem_tile_bytes(b.shape, 4) for b in self.padded_biases))
        self._param_hbm_bytes = (
            sum(int(np.prod(w.shape)) * w.dtype.itemsize for w in self.padded_weights)
            + sum(int(np.prod(b.shape)) * 4 for b in self.padded_biases))
        self._max_width_vmem = max(
            [_round_up(self.in_features, _LANE)] + [_round_up(d, _LANE) for d in dims_out])

        cap = _vmem_capacity_bytes()
        self._tile_budget = int(cap * 0.70)   # budget used when sizing the batch tile
        self._vmem_limit = int(cap * 0.85)    # requested scoped-VMEM limit (headroom kept)
        self._weights_fit_vmem = self._vmem_estimate(_SUBLANE) <= self._tile_budget

    # ---- runtime-parameter chain (mirrors the kernel math exactly) -----------
    def _runtime_chain(self, h):
        n = len(self.padded_weights)
        for i, (w, b) in enumerate(zip(self.padded_weights, self.padded_biases)):
            h = jnp.dot(h.astype(w.dtype), w, preferred_element_type=jnp.float32) + b
            if i < n - 1:
                h = _apply_activation(h, self.activations[i]).astype(self._hidden_dtype)
        return h

    # ---- VMEM sizing ----------------------------------------------------------
    def _vmem_estimate(self, tb):
        # The pipeline double-buffers EVERY input (even constant-index weights)
        # and the output, so params and I/O tiles are counted twice.
        x_tile = _vmem_tile_bytes((tb, self.in_features), 4)
        out_tile = _vmem_tile_bytes((tb, self.out_features), 4)
        io = 2 * (x_tile + out_tile)
        params = 2 * self._param_vmem_bytes
        act = 3 * _round_up(tb, _SUBLANE) * self._max_width_vmem * 4  # live f32 activations
        return io + params + act

    def _choose_batch_tile(self, batch):
        cap_rows = _round_up(max(batch, 1), _SUBLANE)
        base = (2048, 1024, 768, 512, 384, 256, 128, 64, 32, 16, 8)
        cands = sorted({min(c, self.max_batch_tile, cap_rows) for c in base}, reverse=True)
        best_tb, best_cost = None, None
        ovh_rows = 128  # ~0.35us per grid step, expressed as equivalent compute rows
        for tb in cands:
            if self._vmem_estimate(tb) > self._tile_budget:
                continue
            steps = -(-batch // tb)
            # Keep >=2 grid steps for large batches so v7x's 2nd TensorCore has work.
            if batch >= 256 and steps < 2:
                continue
            cost = tb * steps + ovh_rows * steps  # computed rows (incl. pad) + step overhead
            if best_cost is None or cost < best_cost:
                best_cost, best_tb = cost, tb
        return best_tb if best_tb is not None else _SUBLANE

    def _cost_estimate(self, tb, steps):
        rows = tb * steps
        flops = 2 * rows * sum(int(w.shape[0]) * int(w.shape[1]) for w in self.padded_weights)
        trans = rows * sum(int(w.shape[1]) for w in self.padded_weights[:-1])
        byts = (rows * self.in_features * 4 + rows * self.out_features * 4
                + self._param_hbm_bytes)
        return pl.CostEstimate(flops=int(flops), transcendentals=int(trans),
                               bytes_accessed=int(byts))

    # ---- forward --------------------------------------------------------------
    def __call__(self, x):
        x = jnp.asarray(x, jnp.float32)     # (batch, in_features), no padding / no copy
        batch = x.shape[0]
        if not self._weights_fit_vmem:
            # TODO(synk): K-tiled weight streaming (emit_pipeline over the widest layer)
            # for parameter sets exceeding the VMEM budget; plain XLA fallback for now.
            return self._runtime_chain(x)
        tb = self._choose_batch_tile(batch)
        steps = -(-batch // tb)
        return _mlp_pallas(x, self.padded_weights, self.padded_biases,
                           self.activations, self._hidden_dtype, tb,
                           self.out_features, self._vmem_limit,
                           self._cost_estimate(tb, steps))

    # ---- pure-JAX reference following the original torch semantics ------------
    def reference(self, x):
        def run(inp):
            h = (inp - self._input_bias_vec) * self._input_transform_vec
            n = len(self._orig_weights_t)
            for i, (w, b) in enumerate(zip(self._orig_weights_t, self._orig_biases)):
                h = h @ w + b
                if i < n - 1:
                    a = self.activations[i]
                    if a == "tanh":
                        h = jnp.tanh(h)
                    elif a == "sigmoid":
                        h = jax.nn.sigmoid(h)
                    elif a == "softplus":
                        h = jax.nn.softplus(h)
                    else:
                        raise ValueError(a)
            return h

        x = jnp.asarray(x, jnp.float32)
        out = run(x)
        if self.zero_at_zero:
            out = out - run(jnp.zeros(x.shape, jnp.float32))
        return out

    # TODO(synk): forward_with_jacobian and get_l2_hessian_bound are analysis-time
    # helpers (batched Jacobians / spectral-norm bounds), not the forward hot path,
    # and are not implemented as Pallas kernels.


# ----------------------------------------------------------------------------
if __name__ == "__main__":
    key = jax.random.PRNGKey(0)
    key_x, key_x2, key_p1, key_p2 = jax.random.split(key, 4)

    in_f, out_f = 4, 2
    widths = [4, 32, 32, 2]
    acts = ["tanh", "sigmoid"]

    x = jax.random.normal(key_x, (8, in_f), jnp.float32)
    x = x.at[-1].set(0.0)  # last row exercises zero_at_zero exactness

    # ---- f32 path: folded normalization + zero_at_zero, tight tolerance --------
    net = FullyConnectedNetworkPallas(
        in_features=in_f, out_features=out_f, activations=acts, widths=widths,
        zero_at_zero=True, input_bias=[0.1, -0.2, 0.3, 0.0],
        input_transform=[1.0, 2.0, 0.5, 1.5],
        compute_dtype=jnp.float32, key=key_p1)
    out = jax.block_until_ready(net(x))
    ref = net.reference(x)
    assert out.shape == (8, out_f)
    np.testing.assert_allclose(np.asarray(out), np.asarray(ref), rtol=1e-4, atol=1e-5)

    # ---- ragged batch (cdiv grid, masked partial last tile) + softplus ---------
    widths2 = [4, 32, 32, 32, 2]
    acts2 = ["tanh", "sigmoid", "softplus"]
    net2 = FullyConnectedNetworkPallas(
        in_features=in_f, out_features=out_f, activations=acts2, widths=widths2,
        compute_dtype=jnp.float32, key=key_p2)
    x2 = jax.random.normal(key_x2, (19, in_f), jnp.float32)
    out2 = jax.block_until_ready(net2(x2))
    ref2 = net2.reference(x2)
    assert out2.shape == (19, out_f)
    np.testing.assert_allclose(np.asarray(out2), np.asarray(ref2), rtol=1e-4, atol=1e-5)

    # ---- bf16 hidden-layer path (f32 layer 0 / biases / accumulation / output) --
    net_bf16 = FullyConnectedNetworkPallas(
        in_features=in_f, out_features=out_f, activations=acts, widths=widths,
        zero_at_zero=True, input_bias=[0.1, -0.2, 0.3, 0.0],
        input_transform=[1.0, 2.0, 0.5, 1.5],
        compute_dtype=jnp.bfloat16, key=key_p1)
    out_bf16 = jax.block_until_ready(net_bf16(x))
    assert out_bf16.shape == (8, out_f)
    assert bool(np.all(np.isfinite(np.asarray(out_bf16))))
    np.testing.assert_allclose(np.asarray(out_bf16), np.asarray(ref), rtol=0.0, atol=0.25)

    print("KERNEL_OK")
</pallas_src>

<mosaic_0001>
module attributes {stable_mosaic.version = 11 : i64} {
  func.func @_mlp_kernel(%arg0: i32, %arg1: memref<8x4xf32, #tpu.memory_space<vmem>>, %arg2: memref<4x128xf32, #tpu.memory_space<vmem>>, %arg3: memref<1x128xf32, #tpu.memory_space<vmem>>, %arg4: memref<128x128xf32, #tpu.memory_space<vmem>>, %arg5: memref<1x128xf32, #tpu.memory_space<vmem>>, %arg6: memref<128x2xf32, #tpu.memory_space<vmem>>, %arg7: memref<1x2xf32, #tpu.memory_space<vmem>>, %arg8: memref<8x2xf32, #tpu.memory_space<vmem>>) attributes {dimension_semantics = [#tpu.dimension_semantics<parallel>], iteration_bounds = array<i64: 1>, scalar_prefetch = 0 : i64, scratch_operands = 0 : i64, tpu.core_type = #tpu.core_type<tc>, window_params = [{transform_indices = @transform_0, window_bounds = array<i64: 8, 4>}, {pipeline_mode = #tpu.pipeline_mode<synchronous>, transform_indices = @transform_1, window_bounds = array<i64: 4, 128>}, {pipeline_mode = #tpu.pipeline_mode<synchronous>, transform_indices = @transform_2, window_bounds = array<i64: 1, 128>}, {pipeline_mode = #tpu.pipeline_mode<synchronous>, transform_indices = @transform_3, window_bounds = array<i64: 128, 128>}, {pipeline_mode = #tpu.pipeline_mode<synchronous>, transform_indices = @transform_4, window_bounds = array<i64: 1, 128>}, {pipeline_mode = #tpu.pipeline_mode<synchronous>, transform_indices = @transform_5, window_bounds = array<i64: 128, 2>}, {pipeline_mode = #tpu.pipeline_mode<synchronous>, transform_indices = @transform_6, window_bounds = array<i64: 1, 2>}, {transform_indices = @transform_7, window_bounds = array<i64: 8, 2>}]} {
    %c0 = arith.constant 0 : index
    %c0_0 = arith.constant 0 : index
    %0 = vector.load %arg1[%c0, %c0_0] : memref<8x4xf32, #tpu.memory_space<vmem>>, vector<8x4xf32>
    %c0_1 = arith.constant 0 : index
    %c0_2 = arith.constant 0 : index
    %1 = vector.load %arg2[%c0_1, %c0_2] : memref<4x128xf32, #tpu.memory_space<vmem>>, vector<4x128xf32>
    %c0_3 = arith.constant 0 : index
    %c0_4 = arith.constant 0 : index
    %2 = vector.load %arg3[%c0_3, %c0_4] : memref<1x128xf32, #tpu.memory_space<vmem>>, vector<1x128xf32>
    %cst = arith.constant dense<0.000000e+00> : vector<8x128xf32>
    %3 = tpu.matmul %0, %1, %cst {dimension_numbers = #tpu.dot_dimension_numbers<[1], [0], [0], [1], [0, 0, 1, 1], [], []>} : vector<8x4xf32>, vector<4x128xf32>, vector<8x128xf32> -> vector<8x128xf32>
    %4 = vector.broadcast %2 : vector<1x128xf32> to vector<8x128xf32>
    %5 = arith.addf %3, %4 : vector<8x128xf32>
    %6 = math.tanh %5 : vector<8x128xf32>
    %c0_5 = arith.constant 0 : index
    %c0_6 = arith.constant 0 : index
    %7 = vector.load %arg4[%c0_5, %c0_6] : memref<128x128xf32, #tpu.memory_space<vmem>>, vector<128x128xf32>
    %c0_7 = arith.constant 0 : index
    %c0_8 = arith.constant 0 : index
    %8 = vector.load %arg5[%c0_7, %c0_8] : memref<1x128xf32, #tpu.memory_space<vmem>>, vector<1x128xf32>
    %cst_9 = arith.constant dense<0.000000e+00> : vector<8x128xf32>
    %9 = tpu.matmul %6, %7, %cst_9 {dimension_numbers = #tpu.dot_dimension_numbers<[1], [0], [0], [1], [0, 0, 1, 1], [], []>} : vector<8x128xf32>, vector<128x128xf32>, vector<8x128xf32> -> vector<8x128xf32>
    %10 = vector.broadcast %8 : vector<1x128xf32> to vector<8x128xf32>
    %11 = arith.addf %9, %10 : vector<8x128xf32>
    %cst_10 = arith.constant 5.000000e-01 : f32
    %12 = vector.broadcast %cst_10 : f32 to vector<8x128xf32>
    %13 = arith.mulf %12, %11 : vector<8x128xf32>
    %14 = math.tanh %13 : vector<8x128xf32>
    %cst_11 = arith.constant 1.000000e+00 : f32
    %15 = vector.broadcast %cst_11 : f32 to vector<8x128xf32>
    %16 = arith.addf %14, %15 : vector<8x128xf32>
    %cst_12 = arith.constant 5.000000e-01 : f32
    %17 = vector.broadcast %cst_12 : f32 to vector<8x128xf32>
    %18 = arith.mulf %17, %16 : vector<8x128xf32>
    %c0_13 = arith.constant 0 : index
    %c0_14 = arith.constant 0 : index
    %19 = vector.load %arg6[%c0_13, %c0_14] : memref<128x2xf32, #tpu.memory_space<vmem>>, vector<128x2xf32>
    %c0_15 = arith.constant 0 : index
    %c0_16 = arith.constant 0 : index
    %20 = vector.load %arg7[%c0_15, %c0_16] : memref<1x2xf32, #tpu.memory_space<vmem>>, vector<1x2xf32>
    %cst_17 = arith.constant dense<0.000000e+00> : vector<8x2xf32>
    %21 = tpu.matmul %18, %19, %cst_17 {dimension_numbers = #tpu.dot_dimension_numbers<[1], [0], [0], [1], [0, 0, 1, 1], [], []>} : vector<8x128xf32>, vector<128x2xf32>, vector<8x2xf32> -> vector<8x2xf32>
    %22 = vector.broadcast %20 : vector<1x2xf32> to vector<8x2xf32>
    %23 = arith.addf %21, %22 : vector<8x2xf32>
    %c0_18 = arith.constant 0 : index
    %c0_19 = arith.constant 0 : index
    %24 = vector.load %arg8[%c0_18, %c0_19] : memref<8x2xf32, #tpu.memory_space<vmem>>, vector<8x2xf32>
    tpu.vector_store %arg8[%c0_18, %c0_19], %23 {strides = array<i32>} : memref<8x2xf32, #tpu.memory_space<vmem>>, vector<8x2xf32>,
    return
  }
  func.func @transform_0(%arg0: i32) -> (i32, i32) {
    %c0_i32 = arith.constant 0 : i32
    %c0_i32_0 = arith.constant 0 : i32
    return %arg0, %c0_i32 : i32, i32
  }
  func.func @transform_1(%arg0: i32) -> (i32, i32) {
    %c0_i32 = arith.constant 0 : i32
    %c0_i32_0 = arith.constant 0 : i32
    %c0_i32_1 = arith.constant 0 : i32
    return %c0_i32, %c0_i32_0 : i32, i32
  }
  func.func @transform_2(%arg0: i32) -> (i32, i32) {
    %c0_i32 = arith.constant 0 : i32
    %c0_i32_0 = arith.constant 0 : i32
    %c0_i32_1 = arith.constant 0 : i32
    return %c0_i32, %c0_i32_0 : i32, i32
  }
  func.func @transform_3(%arg0: i32) -> (i32, i32) {
    %c0_i32 = arith.constant 0 : i32
    %c0_i32_0 = arith.constant 0 : i32
    %c0_i32_1 = arith.constant 0 : i32
    return %c0_i32, %c0_i32_0 : i32, i32
  }
  func.func @transform_4(%arg0: i32) -> (i32, i32) {
    %c0_i32 = arith.constant 0 : i32
    %c0_i32_0 = arith.constant 0 : i32
    %c0_i32_1 = arith.constant 0 : i32
    return %c0_i32, %c0_i32_0 : i32, i32
  }
  func.func @transform_5(%arg0: i32) -> (i32, i32) {
    %c0_i32 = arith.constant 0 : i32
    %c0_i32_0 = arith.constant 0 : i32
    %c0_i32_1 = arith.constant 0 : i32
    return %c0_i32, %c0_i32_0 : i32, i32
  }
  func.func @transform_6(%arg0: i32) -> (i32, i32) {
    %c0_i32 = arith.constant 0 : i32
    %c0_i32_0 = arith.constant 0 : i32
    %c0_i32_1 = arith.constant 0 : i32
    return %c0_i32, %c0_i32_0 : i32, i32
  }
  func.func @transform_7(%arg0: i32) -> (i32, i32) {
    %c0_i32 = arith.constant 0 : i32
    %c0_i32_0 = arith.constant 0 : i32
    return %arg0, %c0_i32 : i32, i32
  }
}

</mosaic_0001>

<llo_original>
// kernel: tpu_custom_call.1
$region0: #{tpu_custom_call.1}
  #allocation0 [shape = 'u32[]', space=smem, size = 0x4, offset = 0x4, fixed_abs, tag = 'smem constant byte address 0x4 - core index']
  #allocation1 [shape = 'u32[144,128]{1,0:T(1,128)}', space=vmem, size = 0x12000, scoped, tag = 'internal scratch']
  %s0 = inlined_call_operand.vmem [shape: f32[8,4], index: 0, kind: input, shape index: {}]
  %s1 = inlined_call_operand.vmem [shape: f32[4,128], index: 1, kind: input, shape index: {}]
  %s2 = inlined_call_operand.vmem [shape: f32[1,128], index: 2, kind: input, shape index: {}]
  %s3 = inlined_call_operand.vmem [shape: f32[128,128], index: 3, kind: input, shape index: {}]
  %s4 = inlined_call_operand.vmem [shape: f32[1,128], index: 4, kind: input, shape index: {}]
  %s5 = inlined_call_operand.vmem [shape: f32[128,2], index: 5, kind: input, shape index: {}]
  %s6 = inlined_call_operand.vmem [shape: f32[1,2], index: 6, kind: input, shape index: {}]
  %s7 = inlined_call_operand.vmem [shape: f32[8,2], index: 7, kind: output, shape index: {}]
  %s8 = sld [smem:[#allocation0]]
  $region38: #{tpu_custom_call.1} parent=0
    _
  %s10 = ssub.s32 1, %s8
  %s11 = scalar_select 0, %s10, %s8
  // Predicated region
  $region2: #{tpu_custom_call.1} parent=0 // pred_check
    _
  $region3: #{tpu_custom_call.1} parent=0 // pred_check_branch
    %13 = sbr.rel (0) target = $region5
  $region4: #{tpu_custom_call.1} parent=0 // pred_region
    _
  $region5: #{tpu_custom_call.1} parent=0 // pred_fallthru
    _
  // Predicated region
  $region6: #{tpu_custom_call.1} parent=0 // pred_check
    _
  $region7: #{tpu_custom_call.1} parent=0 // pred_check_branch
    %15 = sbr.rel (0) target = $region9
  $region8: #{tpu_custom_call.1} parent=0 // pred_region
    _
  $region9: #{tpu_custom_call.1} parent=0 // pred_fallthru
    _
  // Predicated region
  $region10: #{tpu_custom_call.1} parent=0 // pred_check
    _
  $region11: #{tpu_custom_call.1} parent=0 // pred_check_branch
    %17 = sbr.rel (0) target = $region13
  $region12: #{tpu_custom_call.1} parent=0 // pred_region
    _
  $region13: #{tpu_custom_call.1} parent=0 // pred_fallthru
    _
  // Predicated region
  $region14: #{tpu_custom_call.1} parent=0 // pred_check
    _
  $region15: #{tpu_custom_call.1} parent=0 // pred_check_branch
    %19 = sbr.rel (0) target = $region17
  $region16: #{tpu_custom_call.1} parent=0 // pred_region
    _
  $region17: #{tpu_custom_call.1} parent=0 // pred_fallthru
    _
  // Predicated region
  $region18: #{tpu_custom_call.1} parent=0 // pred_check
    _
  $region19: #{tpu_custom_call.1} parent=0 // pred_check_branch
    %21 = sbr.rel (0) target = $region21
  $region20: #{tpu_custom_call.1} parent=0 // pred_region
    _
  $region21: #{tpu_custom_call.1} parent=0 // pred_fallthru
    _
  // Predicated region
  $region22: #{tpu_custom_call.1} parent=0 // pred_check
    _
  $region23: #{tpu_custom_call.1} parent=0 // pred_check_branch
    %23 = sbr.rel (0) target = $region25
  $region24: #{tpu_custom_call.1} parent=0 // pred_region
    _
  $region25: #{tpu_custom_call.1} parent=0 // pred_fallthru
    _
  // Predicated region
  $region26: #{tpu_custom_call.1} parent=0 // pred_check
    _
  $region27: #{tpu_custom_call.1} parent=0 // pred_check_branch
    %25 = sbr.rel (0) target = $region29
  $region28: #{tpu_custom_call.1} parent=0 // pred_region
    _
  $region29: #{tpu_custom_call.1} parent=0 // pred_fallthru
    _
  %v26 = vld [vmem:[%s0] sm:$0xff]
  %v27 = vld [vmem:[%s1] sm:$0xf]
  %v28 = vld [vmem:[%s2] sm:$0x1]
  %v30 = vlaneseq
  %v31 = vshrl.u32 %v30, 7
  %v32 = vsub.s32 0, %v31
  %v33 = vrot.slane %v28, %v32
  %vm35 = vcmask 31744
  %v37 = vsel %vm35, %v26, 0
  %vm39 = vcmask 1043456
  %v41 = vsel %vm39, %v27, 0
  %43 = vmatprep.subr.mxu0 0.0
  %44 = vmatpush1.msra.mxu0 %v41
  %45 = vmatprep.subr.mxu0 0.0
  %46 = vmatpush1.msra.mxu0 0.0
  %47 = vmatprep.subr.mxu0 0.0
  %48 = vmatpush1.msra.mxu0 0.0
  %49 = vmatprep.subr.mxu0 0.0
  %50 = vmatpush1.msra.mxu0 0.0
  %51 = vmatprep.subr.mxu0 0.0
  %52 = vmatpush1.msra.mxu0 0.0
  %53 = vmatprep.subr.mxu0 0.0
  %54 = vmatpush1.msra.mxu0 0.0
  %55 = vmatprep.subr.mxu0 0.0
  %56 = vmatpush1.msra.mxu0 0.0
  %57 = vmatprep.subr.mxu0 0.0
  %58 = vmatpush1.msra.mxu0 0.0
  %59 = vmatprep.subr.mxu0 0.0
  %60 = vmatpush1.msra.mxu0 0.0
  %61 = vmatprep.subr.mxu0 0.0
  %62 = vmatpush1.msra.mxu0 0.0
  %63 = vmatprep.subr.mxu0 0.0
  %64 = vmatpush1.msra.mxu0 0.0
  %65 = vmatprep.subr.mxu0 0.0
  %66 = vmatpush1.msra.mxu0 0.0
  %67 = vmatprep.subr.mxu0 0.0
  %68 = vmatpush1.msra.mxu0 0.0
  %69 = vmatprep.subr.mxu0 0.0
  %70 = vmatpush1.msra.mxu0 0.0
  %71 = vmatprep.subr.mxu0 0.0
  %72 = vmatpush1.msra.mxu0 0.0
  %73 = vmatprep.subr.mxu0 0.0
  %74 = vmatpush1.msra.mxu0 0.0
  %75 = vmatprep.subr.mxu0 0.0
  %76 = vmatpush1.msra.mxu0 0.0
  %77 = vmatprep.subr.mxu0 0.0
  %78 = vmatpush1.msra.mxu0 0.0
  %79 = vmatprep.subr.mxu0 0.0
  %80 = vmatpush1.msra.mxu0 0.0
  %81 = vmatprep.subr.mxu0 0.0
  %82 = vmatpush1.msra.mxu0 0.0
  %83 = vmatprep.subr.mxu0 0.0
  %84 = vmatpush1.msra.mxu0 0.0
  %85 = vmatprep.subr.mxu0 0.0
  %86 = vmatpush1.msra.mxu0 0.0
  %87 = vmatprep.subr.mxu0 0.0
  %88 = vmatpush1.msra.mxu0 0.0
  %89 = vmatprep.subr.mxu0 0.0
  %90 = vmatpush1.msra.mxu0 0.0
  %91 = vmatprep.subr.mxu0 0.0
  %92 = vmatpush1.msra.mxu0 0.0
  %93 = vmatprep.subr.mxu0 0.0
  %94 = vmatpush1.msra.mxu0 0.0
  %95 = vmatprep.subr.mxu0 0.0
  %96 = vmatpush1.msra.mxu0 0.0
  %97 = vmatprep.subr.mxu0 0.0
  %98 = vmatpush1.msra.mxu0 0.0
  %99 = vmatprep.subr.mxu0 0.0
  %100 = vmatpush1.msra.mxu0 0.0
  %101 = vmatprep.subr.mxu0 0.0
  %102 = vmatpush1.msra.mxu0 0.0
  %103 = vmatprep.subr.mxu0 0.0
  %104 = vmatpush1.msra.mxu0 0.0
  %105 = vmatprep.subr.mxu0 0.0
  %106 = vmatpush1.msra.mxu0 0.0
  %107 = vmatprep.mubr.f32.mxu0 0.0
  %108 = vmatmul.mubr.f32.gmra.mrb[0].mxu0 %v37
  %v109 = vpop.f32.mrb[0].mxu0
  %v110 = vadd.f32 %v33, %v109
  %v111 = vpop.f32.mrb[0].mxu0
  %112 = vdwg.mxu0
  %v113 = vtanh.pop %v110
  %v114 = vld [vmem:[%s3] sm:$0xff]
  %v115 = vld [vmem:[%s3 + $0x8] sm:$0xff]
  %v116 = vld [vmem:[%s3 + $0x10] sm:$0xff]
  %v117 = vld [vmem:[%s3 + $0x18] sm:$0xff]
  %v118 = vld [vmem:[%s3 + $0x20] sm:$0xff]
  %v119 = vld [vmem:[%s3 + $0x28] sm:$0xff]
  %v120 = vld [vmem:[%s3 + $0x30] sm:$0xff]
  %v121 = vld [vmem:[%s3 + $0x38] sm:$0xff]
  %v122 = vld [vmem:[%s3 + $0x40] sm:$0xff]
  %v123 = vld [vmem:[%s3 + $0x48] sm:$0xff]
  %v124 = vld [vmem:[%s3 + $0x50] sm:$0xff]
  %v125 = vld [vmem:[%s3 + $0x58] sm:$0xff]
  %v126 = vld [vmem:[%s3 + $0x60] sm:$0xff]
  %v127 = vld [vmem:[%s3 + $0x68] sm:$0xff]
  %v128 = vld [vmem:[%s3 + $0x70] sm:$0xff]
  %v129 = vld [vmem:[%s3 + $0x78] sm:$0xff]
  %v130 = vld [vmem:[%s4] sm:$0x1]
  %v132 = vlaneseq
  %v133 = vshrl.u32 %v132, 7
  %v134 = vsub.s32 0, %v133
  %v135 = vrot.slane %v130, %v134
  %137 = vmatprep.subr.mxu0 0.0
  %138 = vmatpush1.msra.mxu0 %v114
  %139 = vmatprep.subr.mxu0 0.0
  %140 = vmatpush1.msra.mxu0 %v115
  %141 = vmatprep.subr.mxu0 0.0
  %142 = vmatpush1.msra.mxu0 %v116
  %143 = vmatprep.subr.mxu0 0.0
  %144 = vmatpush1.msra.mxu0 %v117
  %145 = vmatprep.subr.mxu0 0.0
  %146 = vmatpush1.msra.mxu0 %v118
  %147 = vmatprep.subr.mxu0 0.0
  %148 = vmatpush1.msra.mxu0 %v119
  %149 = vmatprep.subr.mxu0 0.0
  %150 = vmatpush1.msra.mxu0 %v120
  %151 = vmatprep.subr.mxu0 0.0
  %152 = vmatpush1.msra.mxu0 %v121
  %153 = vmatprep.subr.mxu0 0.0
  %154 = vmatpush1.msra.mxu0 %v122
  %155 = vmatprep.subr.mxu0 0.0
  %156 = vmatpush1.msra.mxu0 %v123
  %157 = vmatprep.subr.mxu0 0.0
  %158 = vmatpush1.msra.mxu0 %v124
  %159 = vmatprep.subr.mxu0 0.0
  %160 = vmatpush1.msra.mxu0 %v125
  %161 = vmatprep.subr.mxu0 0.0
  %162 = vmatpush1.msra.mxu0 %v126
  %163 = vmatprep.subr.mxu0 0.0
  %164 = vmatpush1.msra.mxu0 %v127
  %165 = vmatprep.subr.mxu0 0.0
  %166 = vmatpush1.msra.mxu0 %v128
  %167 = vmatprep.subr.mxu0 0.0
  %168 = vmatpush1.msra.mxu0 %v129
  %169 = vmatprep.subr.mxu0 0.0
  %170 = vmatpush1.msra.mxu0 0.0
  %171 = vmatprep.subr.mxu0 0.0
  %172 = vmatpush1.msra.mxu0 0.0
  %173 = vmatprep.subr.mxu0 0.0
  %174 = vmatpush1.msra.mxu0 0.0
  %175 = vmatprep.subr.mxu0 0.0
  %176 = vmatpush1.msra.mxu0 0.0
  %177 = vmatprep.subr.mxu0 0.0
  %178 = vmatpush1.msra.mxu0 0.0
  %179 = vmatprep.subr.mxu0 0.0
  %180 = vmatpush1.msra.mxu0 0.0
  %181 = vmatprep.subr.mxu0 0.0
  %182 = vmatpush1.msra.mxu0 0.0
  %183 = vmatprep.subr.mxu0 0.0
  %184 = vmatpush1.msra.mxu0 0.0
  %185 = vmatprep.subr.mxu0 0.0
  %186 = vmatpush1.msra.mxu0 0.0
  %187 = vmatprep.subr.mxu0 0.0
  %188 = vmatpush1.msra.mxu0 0.0
  %189 = vmatprep.subr.mxu0 0.0
  %190 = vmatpush1.msra.mxu0 0.0
  %191 = vmatprep.subr.mxu0 0.0
  %192 = vmatpush1.msra.mxu0 0.0
  %193 = vmatprep.subr.mxu0 0.0
  %194 = vmatpush1.msra.mxu0 0.0
  %195 = vmatprep.subr.mxu0 0.0
  %196 = vmatpush1.msra.mxu0 0.0
  %197 = vmatprep.subr.mxu0 0.0
  %198 = vmatpush1.msra.mxu0 0.0
  %199 = vmatprep.subr.mxu0 0.0
  %200 = vmatpush1.msra.mxu0 0.0
  %201 = vmatprep.mubr.f32.mxu0 0.0
  %202 = vmatmul.mubr.f32.gmra.mrb[0].mxu0 %v113
  %v203 = vpop.f32.mrb[0].mxu0
  %v204 = vadd.f32 %v135, %v203
  %v205 = vpop.f32.mrb[0].mxu0
  %206 = vdwg.mxu0
  %v207 = vmul.f32 %v204, 0.5
  %v208 = vtanh.pop %v207
  %v209 = vadd.f32 %v208, 1.0
  %v210 = vmul.f32 %v209, 0.5
  %v211 = vld [vmem:[%s5] sm:$0xff]
  %v212 = vld [vmem:[%s5 + $0x8] sm:$0xff]
  %v213 = vld [vmem:[%s5 + $0x10] sm:$0xff]
  %v214 = vld [vmem:[%s5 + $0x18] sm:$0xff]
  %v215 = vld [vmem:[%s5 + $0x20] sm:$0xff]
  %v216 = vld [vmem:[%s5 + $0x28] sm:$0xff]
  %v217 = vld [vmem:[%s5 + $0x30] sm:$0xff]
  %v218 = vld [vmem:[%s5 + $0x38] sm:$0xff]
  %v219 = vld [vmem:[%s5 + $0x40] sm:$0xff]
  %v220 = vld [vmem:[%s5 + $0x48] sm:$0xff]
  %v221 = vld [vmem:[%s5 + $0x50] sm:$0xff]
  %v222 = vld [vmem:[%s5 + $0x58] sm:$0xff]
  %v223 = vld [vmem:[%s5 + $0x60] sm:$0xff]
  %v224 = vld [vmem:[%s5 + $0x68] sm:$0xff]
  %v225 = vld [vmem:[%s5 + $0x70] sm:$0xff]
  %v226 = vld [vmem:[%s5 + $0x78] sm:$0xff]
  %v227 = vld [vmem:[%s6] sm:$0x1]
  %v229 = vlaneseq
  %v230 = vshrl.u32 %v229, 7
  %v231 = vsub.s32 0, %v230
  %v232 = vrot.slane %v227, %v231
  %234 = vmatprep.subr.mxu0 0.0
  %235 = vmatpush1.msra.mxu0 %v211
  %236 = vmatprep.subr.mxu0 0.0
  %237 = vmatpush1.msra.mxu0 %v212
  %238 = vmatprep.subr.mxu0 0.0
  %239 = vmatpush1.msra.mxu0 %v213
  %240 = vmatprep.subr.mxu0 0.0
  %241 = vmatpush1.msra.mxu0 %v214
  %242 = vmatprep.subr.mxu0 0.0
  %243 = vmatpush1.msra.mxu0 %v215
  %244 = vmatprep.subr.mxu0 0.0
  %245 = vmatpush1.msra.mxu0 %v216
  %246 = vmatprep.subr.mxu0 0.0
  %247 = vmatpush1.msra.mxu0 %v217
  %248 = vmatprep.subr.mxu0 0.0
  %249 = vmatpush1.msra.mxu0 %v218
  %250 = vmatprep.subr.mxu0 0.0
  %251 = vmatpush1.msra.mxu0 %v219
  %252 = vmatprep.subr.mxu0 0.0
  %253 = vmatpush1.msra.mxu0 %v220
  %254 = vmatprep.subr.mxu0 0.0
  %255 = vmatpush1.msra.mxu0 %v221
  %256 = vmatprep.subr.mxu0 0.0
  %257 = vmatpush1.msra.mxu0 %v222
  %258 = vmatprep.subr.mxu0 0.0
  %259 = vmatpush1.msra.mxu0 %v223
  %260 = vmatprep.subr.mxu0 0.0
  %261 = vmatpush1.msra.mxu0 %v224
  %262 = vmatprep.subr.mxu0 0.0
  %263 = vmatpush1.msra.mxu0 %v225
  %264 = vmatprep.subr.mxu0 0.0
  %265 = vmatpush1.msra.mxu0 %v226
  %266 = vmatprep.subr.mxu0 0.0
  %267 = vmatpush1.msra.mxu0 0.0
  %268 = vmatprep.subr.mxu0 0.0
  %269 = vmatpush1.msra.mxu0 0.0
  %270 = vmatprep.subr.mxu0 0.0
  %271 = vmatpush1.msra.mxu0 0.0
  %272 = vmatprep.subr.mxu0 0.0
  %273 = vmatpush1.msra.mxu0 0.0
  %274 = vmatprep.subr.mxu0 0.0
  %275 = vmatpush1.msra.mxu0 0.0
  %276 = vmatprep.subr.mxu0 0.0
  %277 = vmatpush1.msra.mxu0 0.0
  %278 = vmatprep.subr.mxu0 0.0
  %279 = vmatpush1.msra.mxu0 0.0
  %280 = vmatprep.subr.mxu0 0.0
  %281 = vmatpush1.msra.mxu0 0.0
  %282 = vmatprep.subr.mxu0 0.0
  %283 = vmatpush1.msra.mxu0 0.0
  %284 = vmatprep.subr.mxu0 0.0
  %285 = vmatpush1.msra.mxu0 0.0
  %286 = vmatprep.subr.mxu0 0.0
  %287 = vmatpush1.msra.mxu0 0.0
  %288 = vmatprep.subr.mxu0 0.0
  %289 = vmatpush1.msra.mxu0 0.0
  %290 = vmatprep.subr.mxu0 0.0
  %291 = vmatpush1.msra.mxu0 0.0
  %292 = vmatprep.subr.mxu0 0.0
  %293 = vmatpush1.msra.mxu0 0.0
  %294 = vmatprep.subr.mxu0 0.0
  %295 = vmatpush1.msra.mxu0 0.0
  %296 = vmatprep.subr.mxu0 0.0
  %297 = vmatpush1.msra.mxu0 0.0
  %298 = vmatprep.mubr.f32.mxu0 0.0
  %299 = vmatmul.mubr.f32.gmra.mrb[0].mxu0 %v210
  %v300 = vpop.f32.mrb[0].mxu0
  %v301 = vadd.f32 %v232, %v300
  %v302 = vpop.f32.mrb[0].mxu0
  %303 = vdwg.mxu0
  %vm304 = vcmask 15360
  %305 = vst.msk [vmem:[%s7] sm:$0xff] %vm304, %v301
  // Predicated region
  $region30: #{tpu_custom_call.1} parent=0 // pred_check
    _
  $region31: #{tpu_custom_call.1} parent=0 // pred_check_branch
    %307 = sbr.rel (0) target = $region33
  $region32: #{tpu_custom_call.1} parent=0 // pred_region
    _
  $region33: #{tpu_custom_call.1} parent=0 // pred_fallthru
    _
  // Predicated region
  $region34: #{tpu_custom_call.1} parent=0 // pred_check
    _
  $region35: #{tpu_custom_call.1} parent=0 // pred_check_branch
    %309 = sbr.rel (0) target = $region37
  $region36: #{tpu_custom_call.1} parent=0 // pred_region
    _
  $region37: #{tpu_custom_call.1} parent=0 // pred_fallthru
    _

</llo_original>
